<compile_context>
chip_gen: v5e
topology: v5e:2x2
jax: 0.10.0
libtpu: 0.0.40
codegen_flags: <defaults>
</compile_context>

<pallas_src>
import jax
import jax.numpy as jnp
from jax.experimental import pallas as pl
from jax.experimental.pallas import tpu as pltpu


HIDDEN = (8, 32)


def _round_up(x, m):
    return ((x + m - 1) // m) * m


def _pick_batch_tile(batch, tb_cap):
    """Lane-aligned batch tile.

    Single tile when the (128-rounded) batch fits under tb_cap; otherwise an
    even number of tiles (>= 2) so v7x's two TensorCores both get work on the
    "parallel" grid axis.  On v5e/v6e larger tb_cap (up to ~65536) is fine and
    simply means fewer per-step overheads -- expose via the tb_cap kwarg.
    """
    b128 = _round_up(max(batch, 1), 128)
    if b128 <= tb_cap:
        return b128
    n = pl.cdiv(batch, tb_cap)
    n = n + (n % 2)                      # even tile count for megacore
    return _round_up(pl.cdiv(batch, n), 128)


def actor_kernel(s_ref, w1_ref, b1_ref, w2_ref, b2_ref, w3_ref, b3_ref, o_ref):
    # s_ref: (in_dim, TB), batch on the lane axis.  Cast is a no-op if the
    # caller already supplies bf16.
    x = s_ref[...].astype(jnp.bfloat16)
    # Layer 1: (8, in) @ (in, TB) -> (8, TB); f32 accumulate, +bias, relu.
    h1 = jnp.dot(w1_ref[...], x, preferred_element_type=jnp.float32)
    h1 = jnp.maximum(h1 + b1_ref[...], 0.0).astype(jnp.bfloat16)
    # Layer 2: (32, 8) @ (8, TB) -> (32, TB)
    h2 = jnp.dot(w2_ref[...], h1, preferred_element_type=jnp.float32)
    h2 = jnp.maximum(h2 + b2_ref[...], 0.0).astype(jnp.bfloat16)
    # Layer 3: (out, 32) @ (32, TB) -> (out, TB); +bias, tanh (f32 epilogue).
    h3 = jnp.dot(w3_ref[...], h2, preferred_element_type=jnp.float32)
    o_ref[...] = jnp.tanh(h3 + b3_ref[...]).astype(o_ref.dtype)


def actor_forward_feature_major(s_t, params, *, out_dtype=jnp.bfloat16, tb_cap=8192):
    """Feature-major entry point: s_t is (input_dim, B); returns (output_dim, B).

    No wrapper-side layout ops at all -- prefer this in programs that can keep
    the (features, batch) layout end-to-end.
    """
    in_dim, batch = s_t.shape
    out_dim = params["w3"].shape[0]

    tb = _pick_batch_tile(batch, tb_cap)
    n_tiles = pl.cdiv(batch, tb)         # partial last block; no explicit pad

    w1 = params["w1"].astype(jnp.bfloat16)
    w2 = params["w2"].astype(jnp.bfloat16)
    w3 = params["w3"].astype(jnp.bfloat16)
    b1, b2, b3 = params["b1"], params["b2"], params["b3"]   # f32, (fan_out, 1)

    # Weights/biases: full-array blocks, constant index map -> VMEM-resident.
    resident = lambda a: pl.BlockSpec(a.shape, lambda i: (0, 0))

    cols = n_tiles * tb                  # columns actually computed
    flops = 2 * cols * (in_dim * HIDDEN[0]
                        + HIDDEN[0] * HIDDEN[1]
                        + HIDDEN[1] * out_dim)
    bytes_accessed = (
        in_dim * batch * s_t.dtype.itemsize            # input
        + out_dim * batch * jnp.dtype(out_dtype).itemsize   # output
        + 2 * (w1.size + w2.size + w3.size)            # bf16 weights
        + 4 * (b1.size + b2.size + b3.size))           # f32 biases

    out_t = pl.pallas_call(
        actor_kernel,
        out_shape=jax.ShapeDtypeStruct((out_dim, batch), out_dtype),
        grid=(n_tiles,),
        in_specs=[
            pl.BlockSpec((in_dim, tb), lambda i: (0, i)),   # batch-tiled input
            resident(w1), resident(b1),
            resident(w2), resident(b2),
            resident(w3), resident(b3),
        ],
        out_specs=pl.BlockSpec((out_dim, tb), lambda i: (0, i)),
        compiler_params=pltpu.CompilerParams(
            dimension_semantics=("parallel",)),
        cost_estimate=pl.CostEstimate(
            flops=flops,
            transcendentals=cols * out_dim,
            bytes_accessed=bytes_accessed),
    )(s_t, w1, b1, w2, b2, w3, b3)

    return out_t


def actor_forward(s, params, *, out_dtype=jnp.bfloat16, tb_cap=8192):
    """PyTorch-compatible: s is (B, input_dim); returns (B, output_dim)."""
    # Single fused transpose + bf16 cast (no pad, no slice on the way out).
    s_t = s.astype(jnp.bfloat16).T
    out_t = actor_forward_feature_major(
        s_t, params, out_dtype=out_dtype, tb_cap=tb_cap)
    return out_t.T


def init_actor_params(key, input_dim, output_dim):
    """nn.Linear-style init: U(-1/sqrt(fan_in), 1/sqrt(fan_in)).

    Weights in torch layout (fan_out, fan_in); biases as (fan_out, 1) so they
    broadcast over the lane (batch) axis inside the kernel.
    """
    dims = [(input_dim, HIDDEN[0]), (HIDDEN[0], HIDDEN[1]), (HIDDEN[1], output_dim)]
    params = {}
    for i, (fan_in, fan_out) in enumerate(dims, start=1):
        key, kw, kb = jax.random.split(key, 3)
        bound = 1.0 / (fan_in ** 0.5)
        params[f"w{i}"] = jax.random.uniform(
            kw, (fan_out, fan_in), jnp.float32, -bound, bound)
        params[f"b{i}"] = jax.random.uniform(
            kb, (fan_out, 1), jnp.float32, -bound, bound)
    return params


def actor_reference_f32(s, params):
    """Pure-f32 reference with the torch module's math structure."""
    h1 = jax.nn.relu(s @ params["w1"].T + params["b1"].T)
    h2 = jax.nn.relu(h1 @ params["w2"].T + params["b2"].T)
    return jnp.tanh(h2 @ params["w3"].T + params["b3"].T)


def actor_reference_bf16(s, params):
    """Mirrors the kernel's bf16-operand / f32-accumulate arithmetic."""
    x = s.astype(jnp.bfloat16).T
    w1 = params["w1"].astype(jnp.bfloat16)
    w2 = params["w2"].astype(jnp.bfloat16)
    w3 = params["w3"].astype(jnp.bfloat16)
    h1 = jnp.dot(w1, x, preferred_element_type=jnp.float32) + params["b1"]
    h1 = jnp.maximum(h1, 0.0).astype(jnp.bfloat16)
    h2 = jnp.dot(w2, h1, preferred_element_type=jnp.float32) + params["b2"]
    h2 = jnp.maximum(h2, 0.0).astype(jnp.bfloat16)
    h3 = jnp.dot(w3, h2, preferred_element_type=jnp.float32) + params["b3"]
    return jnp.tanh(h3).T


if __name__ == "__main__":
    key = jax.random.PRNGKey(0)
    batch, input_dim, output_dim = 2, 4, 2

    key, ks, ks_big = jax.random.split(key, 3)
    s = jax.random.normal(ks, (batch, input_dim), dtype=jnp.float32)
    params = init_actor_params(key, input_dim, output_dim)

    # Small batch: single grid step, partial block (2 valid of 128 lane cols),
    # default bf16 output.
    out = actor_forward(s, params)
    jax.block_until_ready(out)
    assert out.shape == (batch, output_dim)
    assert out.dtype == jnp.bfloat16
    assert jnp.allclose(out.astype(jnp.float32), actor_reference_bf16(s, params),
                        atol=1e-2), "mismatch vs bf16-path reference"
    assert jnp.allclose(out.astype(jnp.float32), actor_reference_f32(s, params),
                        atol=5e-2), "mismatch vs f32 reference"

    # Larger batch, f32 output: single 640-wide tile with a partial block
    # (600 valid columns), no explicit padding anywhere.
    s_big = jax.random.normal(ks_big, (600, input_dim), dtype=jnp.float32)
    out_big = actor_forward(s_big, params, out_dtype=jnp.float32)
    jax.block_until_ready(out_big)
    assert out_big.shape == (600, output_dim)
    assert jnp.allclose(out_big, actor_reference_bf16(s_big, params), atol=1e-4)
    assert jnp.allclose(out_big, actor_reference_f32(s_big, params), atol=5e-2)

    # Multi-tile pipelined path (forced by a tiny tb_cap): grid > 1 with a
    # partial last block; must agree exactly with the single-tile result.
    out_tiled = actor_forward(s_big, params, out_dtype=jnp.float32, tb_cap=256)
    jax.block_until_ready(out_tiled)
    assert jnp.allclose(out_tiled, out_big, atol=1e-6)

    # Feature-major entry point: zero wrapper layout ops.
    out_fm = actor_forward_feature_major(s_big.astype(jnp.bfloat16).T, params)
    jax.block_until_ready(out_fm)
    assert out_fm.shape == (output_dim, 600)
    assert jnp.allclose(out_fm.T.astype(jnp.float32),
                        actor_reference_bf16(s_big, params), atol=1e-2)

    print("KERNEL_OK")
</pallas_src>

<mosaic_0001>
module attributes {stable_mosaic.version = 11 : i64} {
  func.func @actor_kernel(%arg0: i32, %arg1: memref<4x128xbf16, #tpu.memory_space<vmem>>, %arg2: memref<8x4xbf16, #tpu.memory_space<vmem>>, %arg3: memref<8x1xf32, #tpu.memory_space<vmem>>, %arg4: memref<32x8xbf16, #tpu.memory_space<vmem>>, %arg5: memref<32x1xf32, #tpu.memory_space<vmem>>, %arg6: memref<2x32xbf16, #tpu.memory_space<vmem>>, %arg7: memref<2x1xf32, #tpu.memory_space<vmem>>, %arg8: memref<2x128xbf16, #tpu.memory_space<vmem>>) attributes {dimension_semantics = [#tpu.dimension_semantics<parallel>], iteration_bounds = array<i64: 1>, scalar_prefetch = 0 : i64, scratch_operands = 0 : i64, tpu.core_type = #tpu.core_type<tc>, window_params = [{transform_indices = @transform_0, window_bounds = array<i64: 4, 128>}, {pipeline_mode = #tpu.pipeline_mode<synchronous>, transform_indices = @transform_1, window_bounds = array<i64: 8, 4>}, {pipeline_mode = #tpu.pipeline_mode<synchronous>, transform_indices = @transform_2, window_bounds = array<i64: 8, 1>}, {pipeline_mode = #tpu.pipeline_mode<synchronous>, transform_indices = @transform_3, window_bounds = array<i64: 32, 8>}, {pipeline_mode = #tpu.pipeline_mode<synchronous>, transform_indices = @transform_4, window_bounds = array<i64: 32, 1>}, {pipeline_mode = #tpu.pipeline_mode<synchronous>, transform_indices = @transform_5, window_bounds = array<i64: 2, 32>}, {pipeline_mode = #tpu.pipeline_mode<synchronous>, transform_indices = @transform_6, window_bounds = array<i64: 2, 1>}, {transform_indices = @transform_7, window_bounds = array<i64: 2, 128>}]} {
    %c0 = arith.constant 0 : index
    %c0_0 = arith.constant 0 : index
    %0 = vector.load %arg1[%c0, %c0_0] : memref<4x128xbf16, #tpu.memory_space<vmem>>, vector<4x128xbf16>
    %c0_1 = arith.constant 0 : index
    %c0_2 = arith.constant 0 : index
    %1 = vector.load %arg2[%c0_1, %c0_2] : memref<8x4xbf16, #tpu.memory_space<vmem>>, vector<8x4xbf16>
    %cst = arith.constant dense<0.000000e+00> : vector<8x128xf32>
    %2 = tpu.matmul %1, %0, %cst {dimension_numbers = #tpu.dot_dimension_numbers<[1], [0], [0], [1], [0, 0, 1, 1], [], []>} : vector<8x4xbf16>, vector<4x128xbf16>, vector<8x128xf32> -> vector<8x128xf32>
    %c0_3 = arith.constant 0 : index
    %c0_4 = arith.constant 0 : index
    %3 = vector.load %arg3[%c0_3, %c0_4] : memref<8x1xf32, #tpu.memory_space<vmem>>, vector<8x1xf32>
    %4 = vector.broadcast %3 : vector<8x1xf32> to vector<8x128xf32>
    %5 = arith.addf %2, %4 : vector<8x128xf32>
    %cst_5 = arith.constant 0.000000e+00 : f32
    %6 = vector.broadcast %cst_5 : f32 to vector<8x128xf32>
    %7 = arith.maximumf %5, %6 : vector<8x128xf32>
    %8 = arith.truncf %7 : vector<8x128xf32> to vector<8x128xbf16>
    %c0_6 = arith.constant 0 : index
    %c0_7 = arith.constant 0 : index
    %9 = vector.load %arg4[%c0_6, %c0_7] : memref<32x8xbf16, #tpu.memory_space<vmem>>, vector<32x8xbf16>
    %cst_8 = arith.constant dense<0.000000e+00> : vector<32x128xf32>
    %10 = tpu.matmul %9, %8, %cst_8 {dimension_numbers = #tpu.dot_dimension_numbers<[1], [0], [0], [1], [0, 0, 1, 1], [], []>} : vector<32x8xbf16>, vector<8x128xbf16>, vector<32x128xf32> -> vector<32x128xf32>
    %c0_9 = arith.constant 0 : index
    %c0_10 = arith.constant 0 : index
    %11 = vector.load %arg5[%c0_9, %c0_10] : memref<32x1xf32, #tpu.memory_space<vmem>>, vector<32x1xf32>
    %12 = vector.broadcast %11 : vector<32x1xf32> to vector<32x128xf32>
    %13 = arith.addf %10, %12 : vector<32x128xf32>
    %cst_11 = arith.constant 0.000000e+00 : f32
    %14 = vector.broadcast %cst_11 : f32 to vector<32x128xf32>
    %15 = arith.maximumf %13, %14 : vector<32x128xf32>
    %16 = arith.truncf %15 : vector<32x128xf32> to vector<32x128xbf16>
    %c0_12 = arith.constant 0 : index
    %c0_13 = arith.constant 0 : index
    %17 = vector.load %arg6[%c0_12, %c0_13] : memref<2x32xbf16, #tpu.memory_space<vmem>>, vector<2x32xbf16>
    %cst_14 = arith.constant dense<0.000000e+00> : vector<2x128xf32>
    %18 = tpu.matmul %17, %16, %cst_14 {dimension_numbers = #tpu.dot_dimension_numbers<[1], [0], [0], [1], [0, 0, 1, 1], [], []>} : vector<2x32xbf16>, vector<32x128xbf16>, vector<2x128xf32> -> vector<2x128xf32>
    %c0_15 = arith.constant 0 : index
    %c0_16 = arith.constant 0 : index
    %19 = vector.load %arg7[%c0_15, %c0_16] : memref<2x1xf32, #tpu.memory_space<vmem>>, vector<2x1xf32>
    %20 = vector.broadcast %19 : vector<2x1xf32> to vector<2x128xf32>
    %21 = arith.addf %18, %20 : vector<2x128xf32>
    %22 = math.tanh %21 : vector<2x128xf32>
    %23 = arith.truncf %22 : vector<2x128xf32> to vector<2x128xbf16>
    %c0_17 = arith.constant 0 : index
    %c0_18 = arith.constant 0 : index
    %24 = vector.load %arg8[%c0_17, %c0_18] : memref<2x128xbf16, #tpu.memory_space<vmem>>, vector<2x128xbf16>
    tpu.vector_store %arg8[%c0_17, %c0_18], %23 {strides = array<i32>} : memref<2x128xbf16, #tpu.memory_space<vmem>>, vector<2x128xbf16>,
    return
  }
  func.func @transform_0(%arg0: i32) -> (i32, i32) {
    %c0_i32 = arith.constant 0 : i32
    %c0_i32_0 = arith.constant 0 : i32
    return %c0_i32, %arg0 : i32, i32
  }
  func.func @transform_1(%arg0: i32) -> (i32, i32) {
    %c0_i32 = arith.constant 0 : i32
    %c0_i32_0 = arith.constant 0 : i32
    %c0_i32_1 = arith.constant 0 : i32
    return %c0_i32, %c0_i32_0 : i32, i32
  }
  func.func @transform_2(%arg0: i32) -> (i32, i32) {
    %c0_i32 = arith.constant 0 : i32
    %c0_i32_0 = arith.constant 0 : i32
    %c0_i32_1 = arith.constant 0 : i32
    return %c0_i32, %c0_i32_0 : i32, i32
  }
  func.func @transform_3(%arg0: i32) -> (i32, i32) {
    %c0_i32 = arith.constant 0 : i32
    %c0_i32_0 = arith.constant 0 : i32
    %c0_i32_1 = arith.constant 0 : i32
    return %c0_i32, %c0_i32_0 : i32, i32
  }
  func.func @transform_4(%arg0: i32) -> (i32, i32) {
    %c0_i32 = arith.constant 0 : i32
    %c0_i32_0 = arith.constant 0 : i32
    %c0_i32_1 = arith.constant 0 : i32
    return %c0_i32, %c0_i32_0 : i32, i32
  }
  func.func @transform_5(%arg0: i32) -> (i32, i32) {
    %c0_i32 = arith.constant 0 : i32
    %c0_i32_0 = arith.constant 0 : i32
    %c0_i32_1 = arith.constant 0 : i32
    return %c0_i32, %c0_i32_0 : i32, i32
  }
  func.func @transform_6(%arg0: i32) -> (i32, i32) {
    %c0_i32 = arith.constant 0 : i32
    %c0_i32_0 = arith.constant 0 : i32
    %c0_i32_1 = arith.constant 0 : i32
    return %c0_i32, %c0_i32_0 : i32, i32
  }
  func.func @transform_7(%arg0: i32) -> (i32, i32) {
    %c0_i32 = arith.constant 0 : i32
    %c0_i32_0 = arith.constant 0 : i32
    return %c0_i32, %arg0 : i32, i32
  }
}

</mosaic_0001>

<llo_original>
// kernel: tpu_custom_call.1
$region0: #{tpu_custom_call.1}
  #allocation0 [shape = 'u32[]', space=smem, size = 0x4, offset = 0x4, fixed_abs, tag = 'smem constant byte address 0x4 - core index']
  #allocation1 [shape = 'u32[72,128]{1,0:T(1,128)}', space=vmem, size = 0x9000, scoped, tag = 'internal scratch']
  %s0 = inlined_call_operand.vmem [shape: bf16[4,2], index: 0, kind: input, shape index: {}]
  %s1 = inlined_call_operand.vmem [shape: bf16[8,4], index: 1, kind: input, shape index: {}]
  %s2 = inlined_call_operand.vmem [shape: f32[8,1], index: 2, kind: input, shape index: {}]
  %s3 = inlined_call_operand.vmem [shape: bf16[32,8], index: 3, kind: input, shape index: {}]
  %s4 = inlined_call_operand.vmem [shape: f32[32,1], index: 4, kind: input, shape index: {}]
  %s5 = inlined_call_operand.vmem [shape: bf16[2,32], index: 5, kind: input, shape index: {}]
  %s6 = inlined_call_operand.vmem [shape: f32[2,1], index: 6, kind: input, shape index: {}]
  %s7 = inlined_call_operand.hbm [shape: bf16[2,2], index: 7, kind: output, shape index: {}]
  %s8 = sld [smem:[#allocation0]]
  $region38: #{tpu_custom_call.1} parent=0
    _
  %s10 = ssub.s32 1, %s8
  %s11 = scalar_select 0, %s10, %s8
  $region1: #{tpu_custom_call.1} parent=0
    #allocation2 [shape = 'u8[512]{0}', space=vmem, size = 0x400, scoped, tag = 'output window, operand 0, single buffered']
    #allocation3 [shape = 's32[1]{0}', space=sflag, size = 0x4, scoped, tag = 'scoped memory for tpu_custom_call.1']
    %12 = vsyncpa [#allocation3], 0
    // Predicated region
    $region2: #{tpu_custom_call.1} parent=1 // pred_check
      _
    $region3: #{tpu_custom_call.1} parent=1 // pred_check_branch
      %14 = sbr.rel (0) target = $region5
    $region4: #{tpu_custom_call.1} parent=1 // pred_region
      _
    $region5: #{tpu_custom_call.1} parent=1 // pred_fallthru
      _
    // Predicated region
    $region6: #{tpu_custom_call.1} parent=1 // pred_check
      _
    $region7: #{tpu_custom_call.1} parent=1 // pred_check_branch
      %16 = sbr.rel (0) target = $region9
    $region8: #{tpu_custom_call.1} parent=1 // pred_region
      _
    $region9: #{tpu_custom_call.1} parent=1 // pred_fallthru
      _
    // Predicated region
    $region10: #{tpu_custom_call.1} parent=1 // pred_check
      _
    $region11: #{tpu_custom_call.1} parent=1 // pred_check_branch
      %18 = sbr.rel (0) target = $region13
    $region12: #{tpu_custom_call.1} parent=1 // pred_region
      _
    $region13: #{tpu_custom_call.1} parent=1 // pred_fallthru
      _
    // Predicated region
    $region14: #{tpu_custom_call.1} parent=1 // pred_check
      _
    $region15: #{tpu_custom_call.1} parent=1 // pred_check_branch
      %20 = sbr.rel (0) target = $region17
    $region16: #{tpu_custom_call.1} parent=1 // pred_region
      _
    $region17: #{tpu_custom_call.1} parent=1 // pred_fallthru
      _
    // Predicated region
    $region18: #{tpu_custom_call.1} parent=1 // pred_check
      _
    $region19: #{tpu_custom_call.1} parent=1 // pred_check_branch
      %22 = sbr.rel (0) target = $region21
    $region20: #{tpu_custom_call.1} parent=1 // pred_region
      _
    $region21: #{tpu_custom_call.1} parent=1 // pred_fallthru
      _
    // Predicated region
    $region22: #{tpu_custom_call.1} parent=1 // pred_check
      _
    $region23: #{tpu_custom_call.1} parent=1 // pred_check_branch
      %24 = sbr.rel (0) target = $region25
    $region24: #{tpu_custom_call.1} parent=1 // pred_region
      _
    $region25: #{tpu_custom_call.1} parent=1 // pred_fallthru
      _
    // Predicated region
    $region26: #{tpu_custom_call.1} parent=1 // pred_check
      _
    $region27: #{tpu_custom_call.1} parent=1 // pred_check_branch
      %26 = sbr.rel (0) target = $region29
    $region28: #{tpu_custom_call.1} parent=1 // pred_region
      _
    $region29: #{tpu_custom_call.1} parent=1 // pred_fallthru
      _
    %v28 = vld [vmem:[%s0] sm:$0x3]
    %v29 = vld [vmem:[%s1] sm:$0xf]
    %v30 = vld [vmem:[%s2] sm:$0xff]
    %32 = vset.pattern.permute.xlu0 0
    %33 = vperm.xlu0 %32, %v30
    %v34 = vpop.permute.xlu0 %33
    %vm36 = vcmask 31744
    %v38 = vsel %vm36, %v29, 0
    %vm40 = vcmask 1041408
    %v42 = vsel %vm40, %v28, 0
    %44 = vmatpush.bf16.msra.mxu0 0
    %45 = vmatpush.bf16.msra.mxu0 0
    %46 = vmatpush.bf16.msra.mxu0 0
    %47 = vmatpush.bf16.msra.mxu0 0
    %48 = vmatpush.bf16.msra.mxu0 0
    %49 = vmatpush.bf16.msra.mxu0 0
    %50 = vmatpush.bf16.msra.mxu0 0
    %51 = vmatpush.bf16.msra.mxu0 %v42
    %52 = vmatmul.bf16.gmra.mxu0 %v38
    %v53 = vpop.f32.mrf.mxu0
    %v54 = vadd.f32 %v34, %v53
    %v55 = vpop.f32.mrf.mxu0
    %56 = vdwg.mxu0
    %v57 = vmax.f32 %v54, 0.0
    %v58 = vpack.c.bf16 %v57, %v57
    %v59 = vld [vmem:[%s3] sm:$0xf]
    %v60 = vld [vmem:[%s3 + $0x4] sm:$0xf]
    %v61 = vld [vmem:[%s3 + $0x8] sm:$0xf]
    %v62 = vld [vmem:[%s3 + $0xc] sm:$0xf]
    %v63 = vld [vmem:[%s4] sm:$0xff]
    %v64 = vld [vmem:[%s4 + $0x8] sm:$0xff]
    %v65 = vld [vmem:[%s4 + $0x10] sm:$0xff]
    %v66 = vld [vmem:[%s4 + $0x18] sm:$0xff]
    %68 = vset.pattern.permute.xlu0 0
    %69 = vperm.xlu0 %68, %v63
    %v70 = vpop.permute.xlu0 %69
    %73 = vset.pattern.permute.xlu0 0
    %74 = vperm.xlu0 %73, %v64
    %v75 = vpop.permute.xlu0 %74
    %78 = vset.pattern.permute.xlu0 0
    %79 = vperm.xlu0 %78, %v65
    %v80 = vpop.permute.xlu0 %79
    %83 = vset.pattern.permute.xlu0 0
    %84 = vperm.xlu0 %83, %v66
    %v85 = vpop.permute.xlu0 %84
    %v91 = vunpack.c.l.b16 %v59
    %v92 = vunpack.c.l.b16 %v60
    %v93 = vunpack.c.l.b16 %v61
    %v94 = vunpack.c.l.b16 %v62
    %v95 = vpack.c.b16 %v92, %v91
    %v96 = vpack.c.b16 %v94, %v93
    %vm97 = vcmask 64512
    %v99 = vsel %vm97, %v95, 0
    %v102 = vsel %vm97, %v96, 0
    %vm104 = vcmask 1043456
    %v106 = vsel %vm104, %v58, 0
    %108 = vmatpush.bf16.msra.mxu0 0
    %109 = vmatpush.bf16.msra.mxu0 0
    %110 = vmatpush.bf16.msra.mxu0 0
    %111 = vmatpush.bf16.msra.mxu0 0
    %112 = vmatpush.bf16.msra.mxu0 0
    %113 = vmatpush.bf16.msra.mxu0 0
    %114 = vmatpush.bf16.msra.mxu0 0
    %115 = vmatpush.bf16.msra.mxu0 %v106
    %116 = vmatmul.bf16.gmra.mxu0 %v99
    %v117 = vpop.f32.mrf.mxu0
    %v118 = vadd.f32 %v70, %v117
    %v119 = vpop.f32.mrf.mxu0
    %v120 = vadd.f32 %v75, %v119
    %121 = vmatmul.bf16.gmra.mxu0 %v102
    %v122 = vpop.f32.mrf.mxu0
    %v123 = vadd.f32 %v80, %v122
    %v124 = vpop.f32.mrf.mxu0
    %v125 = vadd.f32 %v85, %v124
    %126 = vdwg.mxu0
    %v127 = vmax.f32 %v118, 0.0
    %v128 = vmax.f32 %v120, 0.0
    %v129 = vmax.f32 %v123, 0.0
    %v130 = vmax.f32 %v125, 0.0
    %v131 = vpack.c.bf16 %v128, %v127
    %v132 = vpack.c.bf16 %v130, %v129
    %v133 = vld [vmem:[%s5] sm:$0x1]
    %v134 = vld [vmem:[%s6] sm:$0x3]
    %136 = vset.pattern.permute.xlu0 0
    %137 = vperm.xlu0 %136, %v134
    %v138 = vpop.permute.xlu0 %137
    %vm140 = vcmask 261120
    %v142 = vsel %vm140, %v133, 0
    %144 = vmatpush.bf16.msra.mxu0 0
    %145 = vmatpush.bf16.msra.mxu0 0
    %146 = vmatpush.bf16.msra.mxu0 0
    %147 = vmatpush.bf16.msra.mxu0 0
    %148 = vmatpush.bf16.msra.mxu0 0
    %149 = vmatpush.bf16.msra.mxu0 0
    %150 = vmatpush.bf16.msra.mxu0 %v132
    %151 = vmatpush.bf16.msra.mxu0 %v131
    %152 = vmatmul.bf16.gmra.mxu0 %v142
    %v153 = vpop.f32.mrf.mxu0
    %v154 = vadd.f32 %v138, %v153
    %v155 = vpop.f32.mrf.mxu0
    %156 = vdwg.mxu0
    %v157 = vtanh.pop %v154
    %v158 = vpack.c.bf16 %v157, %v157
    %159 = vst [vmem:[#allocation2] sm:$0x1] %v158
    // Predicated region
    $region30: #{tpu_custom_call.1} parent=1 // pred_check
      _
    $region31: #{tpu_custom_call.1} parent=1 // pred_check_branch
      %161 = sbr.rel (0) target = $region33
    $region32: #{tpu_custom_call.1} parent=1 // pred_region
      %163 = vsyncadd [#allocation3], 0
      %s165 = sshll.u32 [#allocation2], 4
      %s166 = int_to_ptr.vmem [resolvable:$true] %s165
      %s167 = sshll.u32 %s7, 4
      %s168 = int_to_ptr.hbm [resolvable:$true] %s167
      %170 = dma.vmem_to_hbm [thread:$0]  %s166, 16, %s168, [#allocation3]
    $region33: #{tpu_custom_call.1} parent=1 // pred_fallthru
      _
    // Predicated region
    $region34: #{tpu_custom_call.1} parent=1 // pred_check
      _
    $region35: #{tpu_custom_call.1} parent=1 // pred_check_branch
      %172 = sbr.rel (0) target = $region37
    $region36: #{tpu_custom_call.1} parent=1 // pred_region
      %174 = dma.done [#allocation3], 16
    $region37: #{tpu_custom_call.1} parent=1 // pred_fallthru
      _
    %175 = vsyncpa [#allocation3], 1

</llo_original>
